<compile_context>
chip_gen: v7x
topology: tpu7x:2x2x1
jax: 0.10.0
libtpu: 0.0.40
codegen_flags: <defaults>
</compile_context>

<pallas_src>
import functools

import jax
import jax.numpy as jnp
from jax import lax
from jax.experimental import pallas as pl
from jax.experimental.pallas import tpu as pltpu

LANES = 128
CHUNK_ROWS = 1024                      # in-kernel compute granularity (rows)
TARGET_BLOCK_BYTES = 4 * 1024 * 1024   # ~4 MiB per input block per grid step


def _pinball_kernel(pred_ref, tgt_ref, out_ref, *, quantile, tile_rows, chunk_rows,
                    n_chunks, acc_rows, total_rows, tiles_per_split,
                    first_masked_tile, any_mask):
    c = pl.program_id(0)   # TensorCore split ("parallel")
    j = pl.program_id(1)   # row tile within the split ("arbitrary", reduction)

    @pl.when(j == 0)
    def _():
        out_ref[...] = jnp.zeros_like(out_ref)

    qf = jnp.float32(quantile)
    qm1f = jnp.float32(quantile - 1.0)

    def chunk_loss(ci):
        r0 = ci * chunk_rows
        if n_chunks > 1:
            r0 = pl.multiple_of(r0, chunk_rows)
        p = pred_ref[pl.ds(r0, chunk_rows), :].astype(jnp.float32)
        t = tgt_ref[pl.ds(r0, chunk_rows), :].astype(jnp.float32)
        err = t - p
        # One select + one multiply instead of two multiplies + max.
        return err * jnp.where(err >= 0, qf, qm1f)

    def accumulate(loss):
        # (chunk,128) -> (chunk//acc_rows, acc_rows, 128) -> (acc_rows, 128):
        # acc_rows independent add chains (VPU), accumulated into the resident
        # output block.  Single cross-lane reduce happens once, in the wrapper.
        part = jnp.sum(loss.reshape(chunk_rows // acc_rows, acc_rows, LANES), axis=0)
        out_ref[...] += part[None]

    def for_each_chunk(chunk_fn):
        if n_chunks == 1:
            chunk_fn(0)
        else:
            def body(ci, carry):
                chunk_fn(ci)
                return carry
            lax.fori_loop(0, n_chunks, body, 0)

    def lean_chunk(ci):
        accumulate(chunk_loss(ci))

    if not any_mask:
        for_each_chunk(lean_chunk)
    else:
        g = c * tiles_per_split + j   # global row-tile index

        # Steady-state tiles: no iota / compare / select.
        @pl.when(g < first_masked_tile)
        def _():
            for_each_chunk(lean_chunk)

        # Last (partial) tile and any clamped dummy tile: zero invalid rows with
        # a select (not a multiply: 0 * NaN garbage would stay NaN).
        @pl.when(g >= first_masked_tile)
        def _():
            row_start = g * tile_rows

            def masked_chunk(ci):
                loss = chunk_loss(ci)
                rows = (row_start + ci * chunk_rows
                        + lax.broadcasted_iota(jnp.int32, (chunk_rows, LANES), 0))
                accumulate(jnp.where(rows < total_rows, loss, jnp.float32(0.0)))

            for_each_chunk(masked_chunk)


def _has_two_tensorcores():
    # TODO(synk): verify on real v7x that the "parallel" leading grid axis shards
    # across both TensorCores; if not, switch it to pltpu.CORE_PARALLEL or an
    # explicit pl.core_map over pltpu.create_tensorcore_mesh.
    try:
        kind = (jax.devices()[0].device_kind or "").lower()
    except Exception:
        return False
    return ("v7" in kind) or ("7x" in kind)


def pinball_loss(predictions, targets, quantile, *, tile_rows=None, n_split=None):
    """Pallas implementation of PinballLoss(quantile)(predictions, targets)."""
    assert predictions.shape == targets.shape
    n = int(predictions.size)
    q = float(quantile)

    p_flat = jnp.ravel(predictions)
    t_flat = jnp.ravel(targets)

    def _jnp_pinball_sum(pe, te):
        e = te.astype(jnp.float32) - pe.astype(jnp.float32)
        return jnp.sum(jnp.maximum((q - 1.0) * e, q * e))

    n_main = (n // LANES) * LANES
    rem = n - n_main

    if n_main == 0:
        # Fewer than 128 elements: not worth a kernel launch.
        return _jnp_pinball_sum(p_flat, t_flat) / n

    if rem:
        # Sub-row remainder (<128 elements) handled with a tiny jnp expression.
        tail_sum = _jnp_pinball_sum(p_flat[n_main:], t_flat[n_main:])
        # TODO(synk): this slice+reshape of the main region is one extra HBM copy
        # per input when n % 128 != 0 (see header comment for the zero-copy plan).
        p_main = p_flat[:n_main]
        t_main = t_flat[:n_main]
    else:
        tail_sum = jnp.float32(0.0)
        p_main = p_flat           # free bitcast reshape below, no copy
        t_main = t_flat

    total_rows = n_main // LANES
    p2 = p_main.reshape(total_rows, LANES)
    t2 = t_main.reshape(total_rows, LANES)

    itemsize_max = max(int(p2.dtype.itemsize), int(t2.dtype.itemsize))
    itemsize_min = min(int(p2.dtype.itemsize), int(t2.dtype.itemsize))
    align = {4: 8, 2: 16, 1: 32}.get(itemsize_min, 32)

    if tile_rows is None:
        # ~4 MiB per input block: 8192 rows (f32) / 16384 rows (bf16).
        tile_rows = TARGET_BLOCK_BYTES // (LANES * itemsize_max)
    tile_rows = max(1, int(tile_rows))

    if total_rows <= min(tile_rows, CHUNK_ROWS):
        tile_rows = chunk_rows = total_rows          # single full-extent block
    elif tile_rows >= CHUNK_ROWS:
        chunk_rows = CHUNK_ROWS
        tile_rows = max(CHUNK_ROWS,
                        (min(tile_rows, total_rows) // CHUNK_ROWS) * CHUNK_ROWS)
    else:
        chunk_rows = tile_rows = max(align, (tile_rows // align) * align)
    n_chunks = tile_rows // chunk_rows

    acc_rows = 64
    while chunk_rows % acc_rows:
        acc_rows //= 2

    n_tiles = pl.cdiv(total_rows, tile_rows)

    two_core = _has_two_tensorcores()
    if n_split is None:
        n_split = 2 if (two_core and n_tiles >= 2) else 1
    n_split = max(1, min(int(n_split), n_tiles))
    tiles_per_split = pl.cdiv(n_tiles, n_split)

    any_mask = n_split * tiles_per_split * tile_rows > total_rows
    first_masked_tile = n_tiles if total_rows % tile_rows == 0 else n_tiles - 1
    needs_clamp = n_split * tiles_per_split > n_tiles

    if needs_clamp:
        # Odd tile count across splits: the dummy tile re-reads a valid block;
        # its rows are all >= total_rows so the in-kernel mask zeroes its sum.
        def in_map(c, j, _tps=tiles_per_split, _last=n_tiles - 1):
            return (jnp.minimum(c * _tps + j, _last), 0)
    else:
        def in_map(c, j, _tps=tiles_per_split):
            return (c * _tps + j, 0)

    kernel = functools.partial(
        _pinball_kernel,
        quantile=q,
        tile_rows=tile_rows,
        chunk_rows=chunk_rows,
        n_chunks=n_chunks,
        acc_rows=acc_rows,
        total_rows=total_rows,
        tiles_per_split=tiles_per_split,
        first_masked_tile=first_masked_tile,
        any_mask=any_mask,
    )

    cost = pl.CostEstimate(
        flops=5 * n_main,
        transcendentals=0,
        bytes_accessed=n_main * (int(p2.dtype.itemsize) + int(t2.dtype.itemsize))
        + n_split * acc_rows * LANES * 4,
    )

    # 128 MiB physical VMEM on v4/v5e/v6e -> 64 MiB scoped limit is free headroom;
    # v7x has only 64 MiB physical, so cap lower there.
    vmem_limit = (48 if two_core else 64) * 1024 * 1024

    partials = pl.pallas_call(
        kernel,
        out_shape=jax.ShapeDtypeStruct((n_split, acc_rows, LANES), jnp.float32),
        grid_spec=pltpu.PrefetchScalarGridSpec(
            num_scalar_prefetch=0,
            grid=(n_split, tiles_per_split),
            in_specs=[
                pl.BlockSpec((tile_rows, LANES), in_map),
                pl.BlockSpec((tile_rows, LANES), in_map),
            ],
            out_specs=pl.BlockSpec((1, acc_rows, LANES), lambda c, j: (c, 0, 0)),
        ),
        compiler_params=pltpu.CompilerParams(
            dimension_semantics=("parallel", "arbitrary"),
            vmem_limit_bytes=vmem_limit,
        ),
        cost_estimate=cost,
    )(p2, t2)

    # Single tiny cross-lane reduce + mean normalization outside the hot loop.
    return (jnp.sum(partials) + tail_sum) / n


if __name__ == "__main__":
    quantile = 0.1

    def reference(pred, tgt):
        e = tgt.astype(jnp.float32) - pred.astype(jnp.float32)
        return jnp.mean(jnp.maximum((quantile - 1.0) * e, quantile * e))

    key = jax.random.PRNGKey(0)
    cases = [
        # (name, shape, extra kwargs)
        ("nchw_aligned", (2, 4, 16, 16), {}),                              # n % 128 == 0
        ("ragged_tail", (7, 50), {}),                                      # n % 128 != 0
        ("multi_tile_gated_mask", (9000, 128), {}),                        # default 8192-row tiles
        ("forced_2way_split", (1300, 128), dict(tile_rows=512, n_split=2)),  # clamp + dummy tile
    ]

    for name, shape, kwargs in cases:
        key, k1, k2 = jax.random.split(key, 3)
        pred = jax.random.normal(k1, shape, dtype=jnp.float32)
        tgt = jax.random.normal(k2, shape, dtype=jnp.float32)
        out = jax.block_until_ready(pinball_loss(pred, tgt, quantile, **kwargs))
        ref = reference(pred, tgt)
        assert jnp.allclose(out, ref, rtol=1e-4, atol=1e-6), (name, float(out), float(ref))

    print("KERNEL_OK")
</pallas_src>

<mosaic_0001>
module attributes {stable_mosaic.version = 11 : i64} {
  func.func @_pinball_kernel(%arg0: i32, %arg1: i32, %arg2: memref<16x128xf32, #tpu.memory_space<vmem>>, %arg3: memref<16x128xf32, #tpu.memory_space<vmem>>, %arg4: memref<1x16x128xf32, #tpu.memory_space<vmem>>) attributes {dimension_semantics = [#tpu.dimension_semantics<parallel>, #tpu.dimension_semantics<arbitrary>], iteration_bounds = array<i64: 1, 1>, scalar_prefetch = 0 : i64, scratch_operands = 0 : i64, tpu.core_type = #tpu.core_type<tc>, window_params = [{transform_indices = @transform_0, window_bounds = array<i64: 16, 128>}, {transform_indices = @transform_1, window_bounds = array<i64: 16, 128>}, {transform_indices = @transform_2, window_bounds = array<i64: 1, 16, 128>}]} {
    %c0_i32 = arith.constant 0 : i32
    %0 = arith.cmpi eq, %arg1, %c0_i32 : i32
    %1 = arith.extui %0 : i1 to i32
    %c0_i32_0 = arith.constant 0 : i32
    %2 = arith.cmpi ne, %1, %c0_i32_0 : i32
    scf.if %2 {
      %cst_13 = arith.constant 0.000000e+00 : f32
      %18 = vector.broadcast %cst_13 : f32 to vector<1x16x128xf32>
      %c0_14 = arith.constant 0 : index
      %c0_15 = arith.constant 0 : index
      %c0_16 = arith.constant 0 : index
      %19 = vector.load %arg4[%c0_14, %c0_15, %c0_16] : memref<1x16x128xf32, #tpu.memory_space<vmem>>, vector<1x16x128xf32>
      tpu.vector_store %arg4[%c0_14, %c0_15, %c0_16], %18 {strides = array<i32>} : memref<1x16x128xf32, #tpu.memory_space<vmem>>, vector<1x16x128xf32>,
    } else {
    }
    %c0 = arith.constant 0 : index
    %c0_1 = arith.constant 0 : index
    %3 = vector.load %arg2[%c0, %c0_1] : memref<16x128xf32, #tpu.memory_space<vmem>>, vector<16x128xf32>
    %c0_2 = arith.constant 0 : index
    %c0_3 = arith.constant 0 : index
    %4 = vector.load %arg3[%c0_2, %c0_3] : memref<16x128xf32, #tpu.memory_space<vmem>>, vector<16x128xf32>
    %5 = arith.subf %4, %3 : vector<16x128xf32>
    %cst = arith.constant 0.000000e+00 : f32
    %6 = vector.broadcast %cst : f32 to vector<16x128xf32>
    %7 = arith.cmpf oge, %5, %6 : vector<16x128xf32>
    %cst_4 = arith.constant 1.000000e-01 : f32
    %cst_5 = arith.constant -0.899999976 : f32
    %8 = vector.broadcast %cst_4 : f32 to vector<16x128xf32>
    %9 = vector.broadcast %cst_5 : f32 to vector<16x128xf32>
    %10 = arith.select %7, %8, %9 : vector<16x128xi1>, vector<16x128xf32>
    %11 = arith.mulf %5, %10 : vector<16x128xf32>
    %12 = vector.shape_cast %11 : vector<16x128xf32> to vector<1x16x128xf32>
    %cst_6 = arith.constant dense<0.000000e+00> : vector<16x128xf32>
    %13 = vector.multi_reduction <add>, %12, %cst_6 [0] : vector<1x16x128xf32> to vector<16x128xf32>
    %c0_7 = arith.constant 0 : index
    %c0_8 = arith.constant 0 : index
    %c0_9 = arith.constant 0 : index
    %14 = vector.load %arg4[%c0_7, %c0_8, %c0_9] : memref<1x16x128xf32, #tpu.memory_space<vmem>>, vector<1x16x128xf32>
    %15 = vector.shape_cast %13 : vector<16x128xf32> to vector<1x16x128xf32>
    %16 = arith.addf %14, %15 : vector<1x16x128xf32>
    %c0_10 = arith.constant 0 : index
    %c0_11 = arith.constant 0 : index
    %c0_12 = arith.constant 0 : index
    %17 = vector.load %arg4[%c0_10, %c0_11, %c0_12] : memref<1x16x128xf32, #tpu.memory_space<vmem>>, vector<1x16x128xf32>
    tpu.vector_store %arg4[%c0_10, %c0_11, %c0_12], %16 {strides = array<i32>} : memref<1x16x128xf32, #tpu.memory_space<vmem>>, vector<1x16x128xf32>,
    return
  }
  func.func @transform_0(%arg0: i32, %arg1: i32) -> (i32, i32) {
    %c1_i32 = arith.constant 1 : i32
    %0 = arith.muli %arg0, %c1_i32 : i32
    %1 = arith.addi %0, %arg1 : i32
    %c0_i32 = arith.constant 0 : i32
    %c0_i32_0 = arith.constant 0 : i32
    return %1, %c0_i32 : i32, i32
  }
  func.func @transform_1(%arg0: i32, %arg1: i32) -> (i32, i32) {
    %c1_i32 = arith.constant 1 : i32
    %0 = arith.muli %arg0, %c1_i32 : i32
    %1 = arith.addi %0, %arg1 : i32
    %c0_i32 = arith.constant 0 : i32
    %c0_i32_0 = arith.constant 0 : i32
    return %1, %c0_i32 : i32, i32
  }
  func.func @transform_2(%arg0: i32, %arg1: i32) -> (i32, i32, i32) {
    %c0_i32 = arith.constant 0 : i32
    %c0_i32_0 = arith.constant 0 : i32
    %c0_i32_1 = arith.constant 0 : i32
    return %arg0, %c0_i32, %c0_i32_0 : i32, i32, i32
  }
}

</mosaic_0001>

<llo_original>
// kernel: tpu_custom_call.1
$region0: #{tpu_custom_call.1}
  #allocation0 [shape = 'u32[]', space=smem, size = 0x4, offset = 0x4, fixed_abs, tag = 'smem constant byte address 0x4 - core index']
  #allocation1 [shape = 'u32[144,128]{1,0:T(1,128)}', space=vmem, size = 0x12000, scoped, tag = 'internal scratch']
  %s0 = inlined_call_operand.hbm [shape: f32[16,128], index: 0, kind: input, shape index: {}]
  %s1 = inlined_call_operand.hbm [shape: f32[16,128], index: 1, kind: input, shape index: {}]
  %s2 = inlined_call_operand.hbm [shape: f32[1,16,128], index: 2, kind: output, shape index: {}]
  %s3 = sld [smem:[#allocation0]]
  $region30: #{tpu_custom_call.1} parent=0
    _
  %s5 = ssub.s32 1, %s3
  %s6 = scalar_select 0, %s5, %s3
  $region1: #{tpu_custom_call.1} parent=0
    #allocation2 [shape = 'u8[8192]{0}', space=vmem, size = 0x2000, scoped, tag = 'input window, operand 0, single buffered']
    #allocation3 [shape = 's32[1]{0}', space=sflag, size = 0x4, scoped, tag = 'scoped memory for tpu_custom_call.1']
    #allocation4 [shape = 's32[1]{0}', space=sflag, size = 0x4, scoped, tag = 'scoped memory for tpu_custom_call.1']
    #allocation5 [shape = 'u8[8192]{0}', space=vmem, size = 0x2000, scoped, tag = 'input window, operand 1, single buffered']
    #allocation6 [shape = 's32[1]{0}', space=sflag, size = 0x4, scoped, tag = 'scoped memory for tpu_custom_call.1']
    #allocation7 [shape = 'u8[8192]{0}', space=vmem, size = 0x2000, scoped, tag = 'output window, operand 0, single buffered']
    %7 = vsyncpa [#allocation3], 0
    %8 = vsyncpa [#allocation6], 0
    %9 = vsyncpa [#allocation4], 0
    // Predicated region
    $region2: #{tpu_custom_call.1} parent=1 // pred_check
      _
    $region3: #{tpu_custom_call.1} parent=1 // pred_check_branch
      %11 = sbr.rel (0) target = $region5
    $region4: #{tpu_custom_call.1} parent=1 // pred_region
      %s12 = sadd.s32 0, 0
      %s13 = smul.u32 2, %s12
      %s15 = ssub.s32 256, 256
      %16 = vsyncadd [#allocation3], %s15
      %s17 = smul.addr %s13, 128
      %s18 = scalar_lea.hbm %s0, %s17
      %s19 = sshll.u32 [#allocation2], 4
      %s20 = int_to_ptr.vmem [resolvable:$true] %s19
      %25 = dma.hbm_to_vmem [thread:$0]  %s18, 256, %s20, [#allocation3], 128, 128, 8
    $region5: #{tpu_custom_call.1} parent=1 // pred_fallthru
      _
    // Predicated region
    $region6: #{tpu_custom_call.1} parent=1 // pred_check
      _
    $region7: #{tpu_custom_call.1} parent=1 // pred_check_branch
      %27 = sbr.rel (0) target = $region9
    $region8: #{tpu_custom_call.1} parent=1 // pred_region
      %s28 = sadd.s32 0, 0
      %s29 = smul.u32 2, %s28
      %s31 = ssub.s32 256, 256
      %32 = vsyncadd [#allocation6], %s31
      %s33 = smul.addr %s29, 128
      %s34 = scalar_lea.hbm %s1, %s33
      %s35 = sshll.u32 [#allocation5], 4
      %s36 = int_to_ptr.vmem [resolvable:$true] %s35
      %41 = dma.hbm_to_vmem [thread:$0]  %s34, 256, %s36, [#allocation6], 128, 128, 8
    $region9: #{tpu_custom_call.1} parent=1 // pred_fallthru
      _
    // Predicated region
    $region10: #{tpu_custom_call.1} parent=1 // pred_check
      _
    $region11: #{tpu_custom_call.1} parent=1 // pred_check_branch
      %43 = sbr.rel (0) target = $region13
    $region12: #{tpu_custom_call.1} parent=1 // pred_region
      %44 = dma.done [#allocation3], 256
    $region13: #{tpu_custom_call.1} parent=1 // pred_fallthru
      _
    // Predicated region
    $region14: #{tpu_custom_call.1} parent=1 // pred_check
      _
    $region15: #{tpu_custom_call.1} parent=1 // pred_check_branch
      %46 = sbr.rel (0) target = $region17
    $region16: #{tpu_custom_call.1} parent=1 // pred_region
      %47 = dma.done [#allocation6], 256
    $region17: #{tpu_custom_call.1} parent=1 // pred_fallthru
      _
    %s48 = sadd.s32 0, 0
    %s49 = smul.u32 2, %s48
    %s50 = sadd.s32 0, 0
    %s51 = smul.u32 2, %s50
    %p52 = scmp.eq.s32.totalorder 0, 0
    // Predicated region
    $region18: #{tpu_custom_call.1} parent=1 // pred_check
      %p53 = pneg %p52
    $region19: #{tpu_custom_call.1} parent=1 // pred_check_branch
      %55 = sbr.rel (%p53) target = $region21
    $region20: #{tpu_custom_call.1} parent=1 // pred_region
      %56 = vst [vmem:[#allocation7] sm:$0xff] 0.0
      %57 = vst [vmem:[#allocation7 + $0x8] sm:$0xff] 0.0
    $region21: #{tpu_custom_call.1} parent=1 // pred_fallthru
      _
    %v58 = vld [vmem:[#allocation2] sm:$0xff]
    %v59 = vld [vmem:[#allocation2 + $0x8] sm:$0xff]
    %v60 = vld [vmem:[#allocation5] sm:$0xff]
    %v61 = vld [vmem:[#allocation5 + $0x8] sm:$0xff]
    %v62 = vsub.f32 %v60, %v58
    %v63 = vsub.f32 %v61, %v59
    %vm64 = vcmp.ge.f32.partialorder %v62, 0.0
    %vm65 = vcmp.ge.f32.partialorder %v63, 0.0
    %v66 = vsel %vm64, 0.1, -0.9
    %v67 = vsel %vm65, 0.1, -0.9
    %v68 = vmul.f32 %v62, %v66
    %v69 = vmul.f32 %v63, %v67
    %v70 = vadd.f32 %v68, 0.0
    %v71 = vadd.f32 %v69, 0.0
    %v72 = vld [vmem:[#allocation7] sm:$0xff]
    %v73 = vld [vmem:[#allocation7 + $0x8] sm:$0xff]
    %v74 = vadd.f32 %v72, %v70
    %v75 = vadd.f32 %v73, %v71
    %76 = vst [vmem:[#allocation7] sm:$0xff] %v74
    %77 = vst [vmem:[#allocation7 + $0x8] sm:$0xff] %v75
    // Predicated region
    $region22: #{tpu_custom_call.1} parent=1 // pred_check
      _
    $region23: #{tpu_custom_call.1} parent=1 // pred_check_branch
      %79 = sbr.rel (0) target = $region25
    $region24: #{tpu_custom_call.1} parent=1 // pred_region
      %s81 = ssub.s32 256, 256
      %82 = vsyncadd [#allocation4], %s81
      %s83 = sshll.u32 [#allocation7], 4
      %s84 = int_to_ptr.vmem [resolvable:$true] %s83
      %89 = dma.vmem_to_hbm [thread:$0]  %s84, 256, %s2, [#allocation4], 128, 128, 8
    $region25: #{tpu_custom_call.1} parent=1 // pred_fallthru
      _
    // Predicated region
    $region26: #{tpu_custom_call.1} parent=1 // pred_check
      _
    $region27: #{tpu_custom_call.1} parent=1 // pred_check_branch
      %91 = sbr.rel (0) target = $region29
    $region28: #{tpu_custom_call.1} parent=1 // pred_region
      %92 = dma.done [#allocation4], 256
    $region29: #{tpu_custom_call.1} parent=1 // pred_fallthru
      _
    %93 = vsyncpa [#allocation3], 1
    %94 = vsyncpa [#allocation6], 1
    %95 = vsyncpa [#allocation4], 1

</llo_original>
